<compile_context>
chip_gen: v6e
topology: v6e:2x2x1
jax: 0.10.0
libtpu: 0.0.40
codegen_flags: <defaults>
</compile_context>

<pallas_src>
import jax
import jax.numpy as jnp
import numpy as np
from jax.experimental import pallas as pl
from jax.experimental.pallas import tpu as pltpu


def _round_up(x, m):
    return (x + m - 1) // m * m


def skipgram_kernel(ids_ref, table_ref, wt_ref, b_ref, out_ref):
    tb = ids_ref.shape[0]
    vocab = table_ref.shape[0]

    ids = ids_ref[...]                                                # (tb, 1) int32
    lane_iota = jax.lax.broadcasted_iota(jnp.int32, (tb, vocab), 1)   # (tb, V)
    onehot = (lane_iota == ids).astype(table_ref.dtype)               # (tb, V) bf16

    # Embedding lookup on the MXU: (tb, V) @ (V, D) -> (tb, D), f32 accumulate.
    emb = jnp.dot(onehot, table_ref[...], preferred_element_type=jnp.float32)

    # Linear: emb @ W^T + b, with W^T pre-transposed to (D, V) (native RHS
    # layout, lane-dense output over V). emb rows are exact bf16 table rows,
    # so the bf16 cast is lossless.
    logits = jnp.dot(emb.astype(wt_ref.dtype), wt_ref[...],
                     preferred_element_type=jnp.float32)              # (tb, V)
    out_ref[...] = logits + b_ref[...]                                # bias bcast (1, V)


def skipgram_forward(ids, embed_table, w, b, *, token_tile=256,
                     param_dtype=jnp.bfloat16):
    """ids: int32 (B, S) -> logits f32 (B, S, V).

    embed_table: (V, D), w: (V, D) (PyTorch Linear layout), b: (V,).
    """
    B, S = ids.shape
    V, D = embed_table.shape
    N = B * S

    # One big tile for small problems, otherwise 256-row tiles (MXU-native on
    # v6e/v7x, 2x the 128-row MXU on v5e) padded to a multiple of 8 sublanes.
    tb = min(token_tile, _round_up(N, 8))
    N_pad = _round_up(N, tb)

    ids_flat = jnp.zeros((N_pad, 1), jnp.int32)
    ids_flat = ids_flat.at[:N, 0].set(ids.reshape(N).astype(jnp.int32))

    table = embed_table.astype(param_dtype)        # (V, D) bf16
    w_t = jnp.transpose(w).astype(param_dtype)     # (D, V) bf16, transposed once here
    b2d = b.reshape(1, V).astype(jnp.float32)

    p_bytes = jnp.dtype(param_dtype).itemsize
    cost = pl.CostEstimate(
        flops=4 * N_pad * V * D,                   # two matmuls, 2*M*N*K each
        transcendentals=0,
        bytes_accessed=(4 * N_pad                  # ids
                        + V * D * p_bytes          # table
                        + D * V * p_bytes          # W^T
                        + 4 * V                    # bias
                        + 4 * N_pad * V),          # logits out
    )

    out_flat = pl.pallas_call(
        skipgram_kernel,
        out_shape=jax.ShapeDtypeStruct((N_pad, V), jnp.float32),
        grid_spec=pltpu.PrefetchScalarGridSpec(
            num_scalar_prefetch=0,
            grid=(N_pad // tb,),
            in_specs=[
                pl.BlockSpec((tb, 1), lambda i: (i, 0)),   # ids tile
                pl.BlockSpec((V, D), lambda i: (0, 0)),    # embedding table (grid-invariant)
                pl.BlockSpec((D, V), lambda i: (0, 0)),    # W^T (grid-invariant)
                pl.BlockSpec((1, V), lambda i: (0, 0)),    # bias (grid-invariant)
            ],
            out_specs=pl.BlockSpec((tb, V), lambda i: (i, 0)),
        ),
        compiler_params=pltpu.CompilerParams(
            dimension_semantics=("parallel",)),
        cost_estimate=cost,
    )(ids_flat, table, w_t, b2d)

    return out_flat[:N].reshape(B, S, V)


if __name__ == "__main__":
    # Small, deterministic setup consistent with skipGram(numWords, embedDim).
    numWords, embedDim = 256, 128
    B, S = 2, 8

    key = jax.random.PRNGKey(0)
    k_emb, k_w, k_b, k_ids = jax.random.split(key, 4)

    # nn.Embedding default init ~ N(0, 1)
    embed_table = jax.random.normal(k_emb, (numWords, embedDim), jnp.float32)
    # nn.Linear default init ~ U(-1/sqrt(in), 1/sqrt(in))
    bound = 1.0 / np.sqrt(embedDim)
    w = jax.random.uniform(k_w, (numWords, embedDim), jnp.float32, -bound, bound)
    b = jax.random.uniform(k_b, (numWords,), jnp.float32, -bound, bound)

    ids = jax.random.randint(k_ids, (B, S), 0, numWords, jnp.int32)

    out = skipgram_forward(ids, embed_table, w, b)
    out = jax.block_until_ready(out)
    assert out.shape == (B, S, numWords)

    # Reference in float64 numpy against bf16-quantized params (the kernel uses
    # bf16 operands with exact f32 MXU accumulation).
    tbl_q = np.asarray(embed_table.astype(jnp.bfloat16).astype(jnp.float32),
                       np.float64)
    w_q = np.asarray(w.astype(jnp.bfloat16).astype(jnp.float32), np.float64)
    ref = tbl_q[np.asarray(ids)] @ w_q.T + np.asarray(b, np.float64)

    np.testing.assert_allclose(np.asarray(out, np.float64), ref,
                               rtol=1e-3, atol=1e-3)

    print("KERNEL_OK")
</pallas_src>

<mosaic_0001>
module attributes {stable_mosaic.version = 11 : i64} {
  func.func @skipgram_kernel(%arg0: i32, %arg1: memref<16x1xi32, #tpu.memory_space<vmem>>, %arg2: memref<256x128xbf16, #tpu.memory_space<vmem>>, %arg3: memref<128x256xbf16, #tpu.memory_space<vmem>>, %arg4: memref<1x256xf32, #tpu.memory_space<vmem>>, %arg5: memref<16x256xf32, #tpu.memory_space<vmem>>) attributes {dimension_semantics = [#tpu.dimension_semantics<parallel>], iteration_bounds = array<i64: 1>, scalar_prefetch = 0 : i64, scratch_operands = 0 : i64, tpu.core_type = #tpu.core_type<tc>, window_params = [{transform_indices = @transform_0, window_bounds = array<i64: 16, 1>}, {pipeline_mode = #tpu.pipeline_mode<synchronous>, transform_indices = @transform_1, window_bounds = array<i64: 256, 128>}, {pipeline_mode = #tpu.pipeline_mode<synchronous>, transform_indices = @transform_2, window_bounds = array<i64: 128, 256>}, {pipeline_mode = #tpu.pipeline_mode<synchronous>, transform_indices = @transform_3, window_bounds = array<i64: 1, 256>}, {transform_indices = @transform_4, window_bounds = array<i64: 16, 256>}]} {
    %c0 = arith.constant 0 : index
    %c0_0 = arith.constant 0 : index
    %0 = vector.load %arg1[%c0, %c0_0] : memref<16x1xi32, #tpu.memory_space<vmem>>, vector<16x1xi32>
    %1 = tpu.iota {dimensions = array<i32: 1>} : vector<16x256xi32>
    %2 = vector.broadcast %0 : vector<16x1xi32> to vector<16x256xi32>
    %3 = arith.cmpi eq, %1, %2 : vector<16x256xi32>
    %4 = arith.extui %3 : vector<16x256xi1> to vector<16x256xi32>
    %5 = arith.sitofp %4 : vector<16x256xi32> to vector<16x256xf32>
    %6 = arith.truncf %5 : vector<16x256xf32> to vector<16x256xbf16>
    %c0_1 = arith.constant 0 : index
    %c0_2 = arith.constant 0 : index
    %7 = vector.load %arg2[%c0_1, %c0_2] : memref<256x128xbf16, #tpu.memory_space<vmem>>, vector<256x128xbf16>
    %cst = arith.constant dense<0.000000e+00> : vector<16x128xf32>
    %8 = tpu.matmul %6, %7, %cst {dimension_numbers = #tpu.dot_dimension_numbers<[1], [0], [0], [1], [0, 0, 1, 1], [], []>} : vector<16x256xbf16>, vector<256x128xbf16>, vector<16x128xf32> -> vector<16x128xf32>
    %9 = arith.truncf %8 : vector<16x128xf32> to vector<16x128xbf16>
    %c0_3 = arith.constant 0 : index
    %c0_4 = arith.constant 0 : index
    %10 = vector.load %arg3[%c0_3, %c0_4] : memref<128x256xbf16, #tpu.memory_space<vmem>>, vector<128x256xbf16>
    %cst_5 = arith.constant dense<0.000000e+00> : vector<16x256xf32>
    %11 = tpu.matmul %9, %10, %cst_5 {dimension_numbers = #tpu.dot_dimension_numbers<[1], [0], [0], [1], [0, 0, 1, 1], [], []>} : vector<16x128xbf16>, vector<128x256xbf16>, vector<16x256xf32> -> vector<16x256xf32>
    %c0_6 = arith.constant 0 : index
    %c0_7 = arith.constant 0 : index
    %12 = vector.load %arg4[%c0_6, %c0_7] : memref<1x256xf32, #tpu.memory_space<vmem>>, vector<1x256xf32>
    %13 = vector.broadcast %12 : vector<1x256xf32> to vector<16x256xf32>
    %14 = arith.addf %11, %13 : vector<16x256xf32>
    %c0_8 = arith.constant 0 : index
    %c0_9 = arith.constant 0 : index
    %15 = vector.load %arg5[%c0_8, %c0_9] : memref<16x256xf32, #tpu.memory_space<vmem>>, vector<16x256xf32>
    tpu.vector_store %arg5[%c0_8, %c0_9], %14 {strides = array<i32>} : memref<16x256xf32, #tpu.memory_space<vmem>>, vector<16x256xf32>,
    return
  }
  func.func @transform_0(%arg0: i32) -> (i32, i32) {
    %c0_i32 = arith.constant 0 : i32
    %c0_i32_0 = arith.constant 0 : i32
    return %arg0, %c0_i32 : i32, i32
  }
  func.func @transform_1(%arg0: i32) -> (i32, i32) {
    %c0_i32 = arith.constant 0 : i32
    %c0_i32_0 = arith.constant 0 : i32
    %c0_i32_1 = arith.constant 0 : i32
    return %c0_i32, %c0_i32_0 : i32, i32
  }
  func.func @transform_2(%arg0: i32) -> (i32, i32) {
    %c0_i32 = arith.constant 0 : i32
    %c0_i32_0 = arith.constant 0 : i32
    %c0_i32_1 = arith.constant 0 : i32
    return %c0_i32, %c0_i32_0 : i32, i32
  }
  func.func @transform_3(%arg0: i32) -> (i32, i32) {
    %c0_i32 = arith.constant 0 : i32
    %c0_i32_0 = arith.constant 0 : i32
    %c0_i32_1 = arith.constant 0 : i32
    return %c0_i32, %c0_i32_0 : i32, i32
  }
  func.func @transform_4(%arg0: i32) -> (i32, i32) {
    %c0_i32 = arith.constant 0 : i32
    %c0_i32_0 = arith.constant 0 : i32
    return %arg0, %c0_i32 : i32, i32
  }
}

</mosaic_0001>

<llo_original>
// kernel: tpu_custom_call.1
$region0: #{tpu_custom_call.1}
  #allocation0 [shape = 'u32[]', space=smem, size = 0x4, offset = 0x4, fixed_abs, tag = 'smem constant byte address 0x4 - core index']
  #allocation1 [shape = 'u32[144,128]{1,0:T(1,128)}', space=vmem, size = 0x12000, scoped, tag = 'internal scratch']
  %s0 = inlined_call_operand.vmem [shape: s32[16,1], index: 0, kind: input, shape index: {}]
  %s1 = inlined_call_operand.hbm [shape: bf16[256,128], index: 1, kind: input, shape index: {}]
  %s2 = inlined_call_operand.hbm [shape: bf16[128,256], index: 2, kind: input, shape index: {}]
  %s3 = inlined_call_operand.vmem [shape: f32[1,256], index: 3, kind: input, shape index: {}]
  %s4 = inlined_call_operand.hbm [shape: f32[16,256], index: 4, kind: output, shape index: {}]
  %s5 = sld [smem:[#allocation0]]
  $region34: #{tpu_custom_call.1} parent=0
    _
  %s7 = ssub.s32 1, %s5
  %s8 = scalar_select 0, %s7, %s5
  $region1: #{tpu_custom_call.1} parent=0
    #allocation2 [shape = 'u8[65536]{0}', space=vmem, size = 0x10000, scoped, tag = 'input window, operand 1, single buffered']
    #allocation3 [shape = 's32[1]{0}', space=sflag, size = 0x4, scoped, tag = 'scoped memory for tpu_custom_call.1']
    #allocation4 [shape = 's32[1]{0}', space=sflag, size = 0x4, scoped, tag = 'scoped memory for tpu_custom_call.1']
    #allocation5 [shape = 'u8[65536]{0}', space=vmem, size = 0x10000, scoped, tag = 'input window, operand 2, single buffered']
    #allocation6 [shape = 's32[1]{0}', space=sflag, size = 0x4, scoped, tag = 'scoped memory for tpu_custom_call.1']
    #allocation7 [shape = 'u8[16384]{0}', space=vmem, size = 0x4000, scoped, tag = 'output window, operand 0, single buffered']
    %9 = vsyncpa [#allocation3], 0
    %10 = vsyncpa [#allocation6], 0
    %11 = vsyncpa [#allocation4], 0
    // Predicated region
    $region2: #{tpu_custom_call.1} parent=1 // pred_check
      _
    $region3: #{tpu_custom_call.1} parent=1 // pred_check_branch
      %13 = sbr.rel (0) target = $region5
    $region4: #{tpu_custom_call.1} parent=1 // pred_region
      _
    $region5: #{tpu_custom_call.1} parent=1 // pred_fallthru
      _
    // Predicated region
    $region6: #{tpu_custom_call.1} parent=1 // pred_check
      _
    $region7: #{tpu_custom_call.1} parent=1 // pred_check_branch
      %15 = sbr.rel (0) target = $region9
    $region8: #{tpu_custom_call.1} parent=1 // pred_region
      %s17 = ssub.s32 2048, 2048
      %18 = vsyncadd [#allocation3], %s17
      %s19 = sshll.u32 [#allocation2], 4
      %s20 = int_to_ptr.vmem [resolvable:$true] %s19
      %25 = dma.hbm_to_vmem [thread:$0]  %s1, 2048, %s20, [#allocation3], 64, 64, 4
    $region9: #{tpu_custom_call.1} parent=1 // pred_fallthru
      _
    // Predicated region
    $region10: #{tpu_custom_call.1} parent=1 // pred_check
      _
    $region11: #{tpu_custom_call.1} parent=1 // pred_check_branch
      %27 = sbr.rel (0) target = $region13
    $region12: #{tpu_custom_call.1} parent=1 // pred_region
      %s29 = ssub.s32 2048, 2048
      %30 = vsyncadd [#allocation6], %s29
      %s31 = sshll.u32 [#allocation5], 4
      %s32 = int_to_ptr.vmem [resolvable:$true] %s31
      %37 = dma.hbm_to_vmem [thread:$0]  %s2, 2048, %s32, [#allocation6], 128, 128, 8
    $region13: #{tpu_custom_call.1} parent=1 // pred_fallthru
      _
    // Predicated region
    $region14: #{tpu_custom_call.1} parent=1 // pred_check
      _
    $region15: #{tpu_custom_call.1} parent=1 // pred_check_branch
      %39 = sbr.rel (0) target = $region17
    $region16: #{tpu_custom_call.1} parent=1 // pred_region
      _
    $region17: #{tpu_custom_call.1} parent=1 // pred_fallthru
      _
    // Predicated region
    $region18: #{tpu_custom_call.1} parent=1 // pred_check
      _
    $region19: #{tpu_custom_call.1} parent=1 // pred_check_branch
      %41 = sbr.rel (0) target = $region21
    $region20: #{tpu_custom_call.1} parent=1 // pred_region
      %42 = dma.done [#allocation3], 2048
    $region21: #{tpu_custom_call.1} parent=1 // pred_fallthru
      _
    // Predicated region
    $region22: #{tpu_custom_call.1} parent=1 // pred_check
      _
    $region23: #{tpu_custom_call.1} parent=1 // pred_check_branch
      %44 = sbr.rel (0) target = $region25
    $region24: #{tpu_custom_call.1} parent=1 // pred_region
      %45 = dma.done [#allocation6], 2048
    $region25: #{tpu_custom_call.1} parent=1 // pred_fallthru
      _
    %v47 = vld [vmem:[%s0] sm:$0xff]
    %v48 = vld [vmem:[%s0 + $0x8] sm:$0xff]
    %v49 = vlaneseq
    %v50 = vand.u32 %v49, 127
    %v51 = vadd.s32 %v50, 128
    %52 = vset.pattern.permute.xlu0 0
    %53 = vperm.xlu0 %52, %v47
    %v54 = vpop.permute.xlu0 %53
    %55 = vset.pattern.permute.xlu0 0
    %56 = vperm.xlu0 %55, %v48
    %v57 = vpop.permute.xlu0 %56
    %vm58 = vcmp.eq.s32.totalorder %v50, %v54
    %vm59 = vcmp.eq.s32.totalorder %v51, %v54
    %vm60 = vcmp.eq.s32.totalorder %v50, %v57
    %vm61 = vcmp.eq.s32.totalorder %v51, %v57
    %v62 = vsel %vm58, 1, 0
    %v63 = vsel %vm59, 1, 0
    %v64 = vsel %vm60, 1, 0
    %v65 = vsel %vm61, 1, 0
    %v66 = vcvt.s32.f32 %v62
    %v67 = vcvt.s32.f32 %v63
    %v68 = vcvt.s32.f32 %v64
    %v69 = vcvt.s32.f32 %v65
    %v70 = vpack.c.bf16 %v68, %v66
    %v71 = vpack.c.bf16 %v69, %v67
    %v72 = vld [vmem:[#allocation2] sm:$0xf]
    %v73 = vld [vmem:[#allocation2 + $0x4] sm:$0xf]
    %v74 = vld [vmem:[#allocation2 + $0x8] sm:$0xf]
    %v75 = vld [vmem:[#allocation2 + $0xc] sm:$0xf]
    %v76 = vld [vmem:[#allocation2 + $0x10] sm:$0xf]
    %v77 = vld [vmem:[#allocation2 + $0x14] sm:$0xf]
    %v78 = vld [vmem:[#allocation2 + $0x18] sm:$0xf]
    %v79 = vld [vmem:[#allocation2 + $0x1c] sm:$0xf]
    %v80 = vld [vmem:[#allocation2 + $0x20] sm:$0xf]
    %v81 = vld [vmem:[#allocation2 + $0x24] sm:$0xf]
    %v82 = vld [vmem:[#allocation2 + $0x28] sm:$0xf]
    %v83 = vld [vmem:[#allocation2 + $0x2c] sm:$0xf]
    %v84 = vld [vmem:[#allocation2 + $0x30] sm:$0xf]
    %v85 = vld [vmem:[#allocation2 + $0x34] sm:$0xf]
    %v86 = vld [vmem:[#allocation2 + $0x38] sm:$0xf]
    %v87 = vld [vmem:[#allocation2 + $0x3c] sm:$0xf]
    %v88 = vld [vmem:[#allocation2 + $0x40] sm:$0xf]
    %v89 = vld [vmem:[#allocation2 + $0x44] sm:$0xf]
    %v90 = vld [vmem:[#allocation2 + $0x48] sm:$0xf]
    %v91 = vld [vmem:[#allocation2 + $0x4c] sm:$0xf]
    %v92 = vld [vmem:[#allocation2 + $0x50] sm:$0xf]
    %v93 = vld [vmem:[#allocation2 + $0x54] sm:$0xf]
    %v94 = vld [vmem:[#allocation2 + $0x58] sm:$0xf]
    %v95 = vld [vmem:[#allocation2 + $0x5c] sm:$0xf]
    %v96 = vld [vmem:[#allocation2 + $0x60] sm:$0xf]
    %v97 = vld [vmem:[#allocation2 + $0x64] sm:$0xf]
    %v98 = vld [vmem:[#allocation2 + $0x68] sm:$0xf]
    %v99 = vld [vmem:[#allocation2 + $0x6c] sm:$0xf]
    %v100 = vld [vmem:[#allocation2 + $0x70] sm:$0xf]
    %v101 = vld [vmem:[#allocation2 + $0x74] sm:$0xf]
    %v102 = vld [vmem:[#allocation2 + $0x78] sm:$0xf]
    %v103 = vld [vmem:[#allocation2 + $0x7c] sm:$0xf]
    %v136 = vunpack.c.l.b16 %v72
    %v137 = vunpack.c.l.b16 %v73
    %v138 = vunpack.c.l.b16 %v74
    %v139 = vunpack.c.l.b16 %v75
    %v140 = vunpack.c.l.b16 %v76
    %v141 = vunpack.c.l.b16 %v77
    %v142 = vunpack.c.l.b16 %v78
    %v143 = vunpack.c.l.b16 %v79
    %v144 = vunpack.c.l.b16 %v80
    %v145 = vunpack.c.l.b16 %v81
    %v146 = vunpack.c.l.b16 %v82
    %v147 = vunpack.c.l.b16 %v83
    %v148 = vunpack.c.l.b16 %v84
    %v149 = vunpack.c.l.b16 %v85
    %v150 = vunpack.c.l.b16 %v86
    %v151 = vunpack.c.l.b16 %v87
    %v152 = vunpack.c.l.b16 %v88
    %v153 = vunpack.c.l.b16 %v89
    %v154 = vunpack.c.l.b16 %v90
    %v155 = vunpack.c.l.b16 %v91
    %v156 = vunpack.c.l.b16 %v92
    %v157 = vunpack.c.l.b16 %v93
    %v158 = vunpack.c.l.b16 %v94
    %v159 = vunpack.c.l.b16 %v95
    %v160 = vunpack.c.l.b16 %v96
    %v161 = vunpack.c.l.b16 %v97
    %v162 = vunpack.c.l.b16 %v98
    %v163 = vunpack.c.l.b16 %v99
    %v164 = vunpack.c.l.b16 %v100
    %v165 = vunpack.c.l.b16 %v101
    %v166 = vunpack.c.l.b16 %v102
    %v167 = vunpack.c.l.b16 %v103
    %v168 = vpack.c.b16 %v137, %v136
    %v169 = vpack.c.b16 %v139, %v138
    %v170 = vpack.c.b16 %v141, %v140
    %v171 = vpack.c.b16 %v143, %v142
    %v172 = vpack.c.b16 %v145, %v144
    %v173 = vpack.c.b16 %v147, %v146
    %v174 = vpack.c.b16 %v149, %v148
    %v175 = vpack.c.b16 %v151, %v150
    %v176 = vpack.c.b16 %v153, %v152
    %v177 = vpack.c.b16 %v155, %v154
    %v178 = vpack.c.b16 %v157, %v156
    %v179 = vpack.c.b16 %v159, %v158
    %v180 = vpack.c.b16 %v161, %v160
    %v181 = vpack.c.b16 %v163, %v162
    %v182 = vpack.c.b16 %v165, %v164
    %v183 = vpack.c.b16 %v167, %v166
    %200 = vmatprep.subr.bf16.mxu0 0
    %201 = vmatpush1.bf16.msra.mxu0 %v175
    %202 = vmatprep.subr.bf16.mxu0 0
    %203 = vmatpush1.bf16.msra.mxu0 %v174
    %204 = vmatprep.subr.bf16.mxu0 0
    %205 = vmatpush1.bf16.msra.mxu0 %v173
    %206 = vmatprep.subr.bf16.mxu0 0
    %207 = vmatpush1.bf16.msra.mxu0 %v172
    %208 = vmatprep.subr.bf16.mxu0 0
    %209 = vmatpush1.bf16.msra.mxu0 %v171
    %210 = vmatprep.subr.bf16.mxu0 0
    %211 = vmatpush1.bf16.msra.mxu0 %v170
    %212 = vmatprep.subr.bf16.mxu0 0
    %213 = vmatpush1.bf16.msra.mxu0 %v169
    %214 = vmatprep.subr.bf16.mxu0 0
    %215 = vmatpush1.bf16.msra.mxu0 %v168
    %216 = vmatprep.subr.bf16.mxu0 0
    %217 = vmatpush2.bf16.msra.mxu0 %v183
    %218 = vmatprep.subr.bf16.mxu0 0
    %219 = vmatpush2.bf16.msra.mxu0 %v182
    %220 = vmatprep.subr.bf16.mxu0 0
    %221 = vmatpush2.bf16.msra.mxu0 %v181
    %222 = vmatprep.subr.bf16.mxu0 0
    %223 = vmatpush2.bf16.msra.mxu0 %v180
    %224 = vmatprep.subr.bf16.mxu0 0
    %225 = vmatpush2.bf16.msra.mxu0 %v179
    %226 = vmatprep.subr.bf16.mxu0 0
    %227 = vmatpush2.bf16.msra.mxu0 %v178
    %228 = vmatprep.subr.bf16.mxu0 0
    %229 = vmatpush2.bf16.msra.mxu0 %v177
    %230 = vmatprep.subr.bf16.mxu0 0
    %231 = vmatpush2.bf16.msra.mxu0 %v176
    %232 = vmatprep.mubr.bf16.mxu0 %v71
    %233 = vmatmul.mubr.bf16.gmra.mxu0 %v70
    %v234 = vpop.f32.mrf.mxu0
    %v235 = vadd.f32 0.0, %v234
    %v236 = vpop.f32.mrf.mxu0
    %v237 = vpop.f32.mrf.mxu0
    %v238 = vadd.f32 0.0, %v237
    %v239 = vpop.f32.mrf.mxu0
    %240 = vdwg.mxu0
    %v241 = vpack.c.bf16 %v238, %v235
    %v242 = vld [vmem:[#allocation5] sm:$0xff]
    %v243 = vld [vmem:[#allocation5 + $0x8] sm:$0xff]
    %v244 = vld [vmem:[#allocation5 + $0x10] sm:$0xff]
    %v245 = vld [vmem:[#allocation5 + $0x18] sm:$0xff]
    %v246 = vld [vmem:[#allocation5 + $0x20] sm:$0xff]
    %v247 = vld [vmem:[#allocation5 + $0x28] sm:$0xff]
    %v248 = vld [vmem:[#allocation5 + $0x30] sm:$0xff]
    %v249 = vld [vmem:[#allocation5 + $0x38] sm:$0xff]
    %v250 = vld [vmem:[#allocation5 + $0x40] sm:$0xff]
    %v251 = vld [vmem:[#allocation5 + $0x48] sm:$0xff]
    %v252 = vld [vmem:[#allocation5 + $0x50] sm:$0xff]
    %v253 = vld [vmem:[#allocation5 + $0x58] sm:$0xff]
    %v254 = vld [vmem:[#allocation5 + $0x60] sm:$0xff]
    %v255 = vld [vmem:[#allocation5 + $0x68] sm:$0xff]
    %v256 = vld [vmem:[#allocation5 + $0x70] sm:$0xff]
    %v257 = vld [vmem:[#allocation5 + $0x78] sm:$0xff]
    %v258 = vld [vmem:[%s3] sm:$0x3]
    %v260 = vlaneseq
    %v261 = vshrl.u32 %v260, 7
    %v262 = vsub.s32 0, %v261
    %v263 = vrot.slane %v258, %v262
    %v264 = vlaneseq
    %v265 = vshrl.u32 %v264, 7
    %v266 = vsub.s32 1, %v265
    %v267 = vrot.slane %v258, %v266
    %v286 = vunpack.c.l.b16 %v242
    %v287 = vunpack.c.h.b16 %v242
    %v288 = vunpack.c.l.b16 %v243
    %v289 = vunpack.c.h.b16 %v243
    %v290 = vunpack.c.l.b16 %v244
    %v291 = vunpack.c.h.b16 %v244
    %v292 = vunpack.c.l.b16 %v245
    %v293 = vunpack.c.h.b16 %v245
    %v294 = vunpack.c.l.b16 %v246
    %v295 = vunpack.c.h.b16 %v246
    %v296 = vunpack.c.l.b16 %v247
    %v297 = vunpack.c.h.b16 %v247
    %v298 = vunpack.c.l.b16 %v248
    %v299 = vunpack.c.h.b16 %v248
    %v300 = vunpack.c.l.b16 %v249
    %v301 = vunpack.c.h.b16 %v249
    %v302 = vunpack.c.l.b16 %v250
    %v303 = vunpack.c.h.b16 %v250
    %v304 = vunpack.c.l.b16 %v251
    %v305 = vunpack.c.h.b16 %v251
    %v306 = vunpack.c.l.b16 %v252
    %v307 = vunpack.c.h.b16 %v252
    %v308 = vunpack.c.l.b16 %v253
    %v309 = vunpack.c.h.b16 %v253
    %v310 = vunpack.c.l.b16 %v254
    %v311 = vunpack.c.h.b16 %v254
    %v312 = vunpack.c.l.b16 %v255
    %v313 = vunpack.c.h.b16 %v255
    %v314 = vunpack.c.l.b16 %v256
    %v315 = vunpack.c.h.b16 %v256
    %v316 = vunpack.c.l.b16 %v257
    %v317 = vunpack.c.h.b16 %v257
    %v318 = vpack.c.b16 %v288, %v286
    %v319 = vpack.c.b16 %v289, %v287
    %v320 = vpack.c.b16 %v292, %v290
    %v321 = vpack.c.b16 %v293, %v291
    %v322 = vpack.c.b16 %v296, %v294
    %v323 = vpack.c.b16 %v297, %v295
    %v324 = vpack.c.b16 %v300, %v298
    %v325 = vpack.c.b16 %v301, %v299
    %v326 = vpack.c.b16 %v304, %v302
    %v327 = vpack.c.b16 %v305, %v303
    %v328 = vpack.c.b16 %v308, %v306
    %v329 = vpack.c.b16 %v309, %v307
    %v330 = vpack.c.b16 %v312, %v310
    %v331 = vpack.c.b16 %v313, %v311
    %v332 = vpack.c.b16 %v316, %v314
    %v333 = vpack.c.b16 %v317, %v315
    %350 = vmatprep.subr.bf16.mxu0 %v333
    %351 = vmatpush1.bf16.msra.mxu0 %v332
    %352 = vmatprep.subr.bf16.mxu0 %v331
    %353 = vmatpush1.bf16.msra.mxu0 %v330
    %354 = vmatprep.subr.bf16.mxu0 %v329
    %355 = vmatpush1.bf16.msra.mxu0 %v328
    %356 = vmatprep.subr.bf16.mxu0 %v327
    %357 = vmatpush1.bf16.msra.mxu0 %v326
    %358 = vmatprep.subr.bf16.mxu0 %v325
    %359 = vmatpush1.bf16.msra.mxu0 %v324
    %360 = vmatprep.subr.bf16.mxu0 %v323
    %361 = vmatpush1.bf16.msra.mxu0 %v322
    %362 = vmatprep.subr.bf16.mxu0 %v321
    %363 = vmatpush1.bf16.msra.mxu0 %v320
    %364 = vmatprep.subr.bf16.mxu0 %v319
    %365 = vmatpush1.bf16.msra.mxu0 %v318
    %366 = vmatprep.subr.bf16.mxu0 0
    %367 = vmatpush2.bf16.msra.mxu0 0
    %368 = vmatprep.subr.bf16.mxu0 0
    %369 = vmatpush2.bf16.msra.mxu0 0
    %370 = vmatprep.subr.bf16.mxu0 0
    %371 = vmatpush2.bf16.msra.mxu0 0
    %372 = vmatprep.subr.bf16.mxu0 0
    %373 = vmatpush2.bf16.msra.mxu0 0
    %374 = vmatprep.subr.bf16.mxu0 0
    %375 = vmatpush2.bf16.msra.mxu0 0
    %376 = vmatprep.subr.bf16.mxu0 0
    %377 = vmatpush2.bf16.msra.mxu0 0
    %378 = vmatprep.subr.bf16.mxu0 0
    %379 = vmatpush2.bf16.msra.mxu0 0
    %380 = vmatprep.subr.bf16.mxu0 0
    %381 = vmatpush2.bf16.msra.mxu0 0
    %382 = vmatprep.mubr.bf16.mxu0 0
    %383 = vmatmul.mubr.bf16.gmra.mxu0 %v241
    %v384 = vpop.f32.mrf.mxu0
    %v385 = vadd.f32 %v263, %v384
    %v386 = vpop.f32.mrf.mxu0
    %v387 = vadd.f32 %v267, %v386
    %v388 = vpop.f32.mrf.mxu0
    %v389 = vadd.f32 %v263, %v388
    %v390 = vpop.f32.mrf.mxu0
    %v391 = vadd.f32 %v267, %v390
    %392 = vdwg.mxu0
    %393 = vst [vmem:[#allocation7] sm:$0xff] %v385
    %394 = vst [vmem:[#allocation7 + $0x8] sm:$0xff] %v387
    %395 = vst [vmem:[#allocation7 + $0x10] sm:$0xff] %v389
    %396 = vst [vmem:[#allocation7 + $0x18] sm:$0xff] %v391
    // Predicated region
    $region26: #{tpu_custom_call.1} parent=1 // pred_check
      _
    $region27: #{tpu_custom_call.1} parent=1 // pred_check_branch
      %398 = sbr.rel (0) target = $region29
    $region28: #{tpu_custom_call.1} parent=1 // pred_region
      %s400 = ssub.s32 512, 512
      %401 = vsyncadd [#allocation4], %s400
      %s402 = sshll.u32 [#allocation7], 4
      %s403 = int_to_ptr.vmem [resolvable:$true] %s402
      %408 = dma.vmem_to_hbm [thread:$0]  %s403, 512, %s4, [#allocation4], 256, 256, 16
    $region29: #{tpu_custom_call.1} parent=1 // pred_fallthru
      _
    // Predicated region
    $region30: #{tpu_custom_call.1} parent=1 // pred_check
      _
    $region31: #{tpu_custom_call.1} parent=1 // pred_check_branch
      %410 = sbr.rel (0) target = $region33
    $region32: #{tpu_custom_call.1} parent=1 // pred_region
      %411 = dma.done [#allocation4], 512
    $region33: #{tpu_custom_call.1} parent=1 // pred_fallthru
      _
    %412 = vsyncpa [#allocation3], 1
    %413 = vsyncpa [#allocation6], 1
    %414 = vsyncpa [#allocation4], 1

</llo_original>
